<compile_context>
chip_gen: v5e
topology: v5e:2x2
jax: 0.10.0
libtpu: 0.0.40
codegen_flags: <defaults>
</compile_context>

<pallas_src>
import jax
import jax.numpy as jnp
from jax.experimental import pallas as pl
from jax.experimental.pallas import tpu as pltpu

LANE = 128


def _ind_mlp_kernel(params_ref, x_ref, o_ref):
    # params_ref: SMEM f32[21] = [w1 (5,2) row-major -> 10, b1 -> 5, w2 -> 5, b2 -> 1]
    # x_ref: VMEM (2, TR, 128)  -- feature-major; batch = sublanes x lanes (full vregs)
    # o_ref: VMEM (TR, 128)
    x0 = x_ref[0]                            # (TR, 128)
    x1 = x_ref[1]                            # (TR, 128)

    acc = jnp.zeros_like(x0)
    # Fully unrolled over the 5 hidden units: pure VPU scalar-broadcast FMAs.
    for j in range(5):
        h = (params_ref[2 * j] * x0
             + params_ref[2 * j + 1] * x1
             + params_ref[10 + j])
        h = jnp.maximum(h, 0.0)              # ReLU (hidden)
        acc = acc + params_ref[15 + j] * h

    o_ref[...] = jnp.maximum(acc + params_ref[20], 0.0)   # ReLU (output)


def ind_forward(x, w1, b1, w2, b2):
    """Pallas implementation of Ind.forward.

    x:  (B, 2) float32
    w1: (5, 2), b1: (5,)   -- PyTorch nn.Linear(2, 5) layout
    w2: (1, 5), b2: (1,)   -- PyTorch nn.Linear(5, 1) layout
    returns (B, 1) float32
    """
    B = x.shape[0]
    NR = pl.cdiv(B, LANE)          # number of 128-wide batch rows
    Bp = NR * LANE

    # Rows per grid block: up to 4096 (4 MiB x-block, 12 MiB double-buffered),
    # but keep >= 2 blocks when possible so v7x can shard across both TCs.
    TR = min(NR, 4096)
    if NR > 8:
        half = (NR + 1) // 2
        TR = min(TR, ((half + 7) // 8) * 8)   # multiple of 8 sublanes
    num_tiles = pl.cdiv(NR, TR)

    # Pack all 21 parameters into one flat f32 array -> single SMEM block.
    params = jnp.concatenate(
        [w1.reshape(-1), b1.reshape(-1), w2.reshape(-1), b2.reshape(-1)]
    ).astype(jnp.float32)

    # Single XLA copy pass: feature-major transpose (+ minimal 128-lane pad),
    # then a free reshape to (2, NR, 128) so the kernel sees full (8,128) tiles.
    xt = jnp.transpose(x.astype(jnp.float32))          # (2, B)
    if Bp != B:
        xt = jnp.pad(xt, ((0, 0), (0, Bp - B)))        # (2, Bp)
    xt = xt.reshape(2, NR, LANE)                       # (2, NR, 128)

    out = pl.pallas_call(
        _ind_mlp_kernel,
        out_shape=jax.ShapeDtypeStruct((NR, LANE), jnp.float32),
        grid_spec=pltpu.PrefetchScalarGridSpec(
            num_scalar_prefetch=0,
            grid=(num_tiles,),
            in_specs=[
                # All weights/biases live in SMEM as scalars.
                pl.BlockSpec(memory_space=pltpu.MemorySpace.SMEM),
                # x block: (2, TR, 128); ragged last block handled by Pallas.
                pl.BlockSpec((2, TR, LANE), lambda i: (0, i, 0)),
            ],
            out_specs=pl.BlockSpec((TR, LANE), lambda i: (i, 0)),
        ),
        compiler_params=pltpu.CompilerParams(
            dimension_semantics=("parallel",),
        ),
        cost_estimate=pl.CostEstimate(
            flops=37 * Bp, transcendentals=0, bytes_accessed=12 * Bp + 21 * 4
        ),
    )(params, xt)

    # Lane-dense output: just reshape (+ crop if padded); no transpose pass.
    out_flat = out.reshape(Bp)
    if Bp != B:
        out_flat = out_flat[:B]
    return out_flat.reshape(B, 1)


def _reference(x, w1, b1, w2, b2):
    h = jnp.maximum(x @ w1.T + b1, 0.0)
    return jnp.maximum(h @ w2.T + b2, 0.0)


if __name__ == "__main__":
    key = jax.random.PRNGKey(0)
    kx, k1, k2, k3, k4, kx2 = jax.random.split(key, 6)

    # Deterministic parameters (nn.Linear(2,5), nn.Linear(5,1) shapes).
    w1 = jax.random.normal(k1, (5, 2), dtype=jnp.float32) * 0.5
    b1 = jax.random.normal(k2, (5,), dtype=jnp.float32) * 0.1
    w2 = jax.random.normal(k3, (1, 5), dtype=jnp.float32) * 0.5
    b2 = jax.random.normal(k4, (1,), dtype=jnp.float32) * 0.1

    # Small batch consistent with Linear(2,5) -> Linear(5,1).
    B = 8
    x = jax.random.normal(kx, (B, 2), dtype=jnp.float32)
    out = ind_forward(x, w1, b1, w2, b2)
    jax.block_until_ready(out)
    ref = _reference(x, w1, b1, w2, b2)
    assert out.shape == (B, 1)
    assert jnp.allclose(out, ref, atol=1e-5), "mismatch vs reference (B=8)"

    # Second check exercising the multi-block ragged grid (still tiny).
    B2 = 2500
    x2 = jax.random.normal(kx2, (B2, 2), dtype=jnp.float32)
    out2 = ind_forward(x2, w1, b1, w2, b2)
    jax.block_until_ready(out2)
    ref2 = _reference(x2, w1, b1, w2, b2)
    assert out2.shape == (B2, 1)
    assert jnp.allclose(out2, ref2, atol=1e-5), "mismatch vs reference (B=2500)"

    print("KERNEL_OK")
</pallas_src>

<mosaic_0001>
module attributes {stable_mosaic.version = 11 : i64} {
  func.func @_ind_mlp_kernel(%arg0: i32, %arg1: memref<21xf32, #tpu.memory_space<smem>>, %arg2: memref<2x1x128xf32, #tpu.memory_space<vmem>>, %arg3: memref<1x128xf32, #tpu.memory_space<vmem>>) attributes {dimension_semantics = [#tpu.dimension_semantics<parallel>], iteration_bounds = array<i64: 1>, scalar_prefetch = 0 : i64, scratch_operands = 0 : i64, tpu.core_type = #tpu.core_type<tc>, window_params = [{transform_indices = @transform_0, window_bounds = array<i64: 21>}, {transform_indices = @transform_1, window_bounds = array<i64: 2, 1, 128>}, {transform_indices = @transform_2, window_bounds = array<i64: 1, 128>}]} {
    %c0 = arith.constant 0 : index
    %c0_0 = arith.constant 0 : index
    %c0_1 = arith.constant 0 : index
    %0 = vector.load %arg2[%c0, %c0_0, %c0_1] : memref<2x1x128xf32, #tpu.memory_space<vmem>>, vector<1x1x128xf32>
    %1 = vector.shape_cast %0 : vector<1x1x128xf32> to vector<1x128xf32>
    %c1 = arith.constant 1 : index
    %c0_2 = arith.constant 0 : index
    %c0_3 = arith.constant 0 : index
    %2 = vector.load %arg2[%c1, %c0_2, %c0_3] : memref<2x1x128xf32, #tpu.memory_space<vmem>>, vector<1x1x128xf32>
    %3 = vector.shape_cast %2 : vector<1x1x128xf32> to vector<1x128xf32>
    %cst = arith.constant 0.000000e+00 : f32
    %4 = vector.broadcast %cst : f32 to vector<1x128xf32>
    %c0_4 = arith.constant 0 : index
    %5 = memref.load %arg1[%c0_4] : memref<21xf32, #tpu.memory_space<smem>>
    %6 = vector.broadcast %5 : f32 to vector<1x128xf32>
    %7 = arith.mulf %6, %1 : vector<1x128xf32>
    %c1_5 = arith.constant 1 : index
    %8 = memref.load %arg1[%c1_5] : memref<21xf32, #tpu.memory_space<smem>>
    %9 = vector.broadcast %8 : f32 to vector<1x128xf32>
    %10 = arith.mulf %9, %3 : vector<1x128xf32>
    %11 = arith.addf %7, %10 : vector<1x128xf32>
    %c10 = arith.constant 10 : index
    %12 = memref.load %arg1[%c10] : memref<21xf32, #tpu.memory_space<smem>>
    %13 = vector.broadcast %12 : f32 to vector<1x128xf32>
    %14 = arith.addf %11, %13 : vector<1x128xf32>
    %cst_6 = arith.constant 0.000000e+00 : f32
    %15 = vector.broadcast %cst_6 : f32 to vector<1x128xf32>
    %16 = arith.maximumf %14, %15 : vector<1x128xf32>
    %c15 = arith.constant 15 : index
    %17 = memref.load %arg1[%c15] : memref<21xf32, #tpu.memory_space<smem>>
    %18 = vector.broadcast %17 : f32 to vector<1x128xf32>
    %19 = arith.mulf %18, %16 : vector<1x128xf32>
    %20 = arith.addf %4, %19 : vector<1x128xf32>
    %c2 = arith.constant 2 : index
    %21 = memref.load %arg1[%c2] : memref<21xf32, #tpu.memory_space<smem>>
    %22 = vector.broadcast %21 : f32 to vector<1x128xf32>
    %23 = arith.mulf %22, %1 : vector<1x128xf32>
    %c3 = arith.constant 3 : index
    %24 = memref.load %arg1[%c3] : memref<21xf32, #tpu.memory_space<smem>>
    %25 = vector.broadcast %24 : f32 to vector<1x128xf32>
    %26 = arith.mulf %25, %3 : vector<1x128xf32>
    %27 = arith.addf %23, %26 : vector<1x128xf32>
    %c11 = arith.constant 11 : index
    %28 = memref.load %arg1[%c11] : memref<21xf32, #tpu.memory_space<smem>>
    %29 = vector.broadcast %28 : f32 to vector<1x128xf32>
    %30 = arith.addf %27, %29 : vector<1x128xf32>
    %cst_7 = arith.constant 0.000000e+00 : f32
    %31 = vector.broadcast %cst_7 : f32 to vector<1x128xf32>
    %32 = arith.maximumf %30, %31 : vector<1x128xf32>
    %c16 = arith.constant 16 : index
    %33 = memref.load %arg1[%c16] : memref<21xf32, #tpu.memory_space<smem>>
    %34 = vector.broadcast %33 : f32 to vector<1x128xf32>
    %35 = arith.mulf %34, %32 : vector<1x128xf32>
    %36 = arith.addf %20, %35 : vector<1x128xf32>
    %c4 = arith.constant 4 : index
    %37 = memref.load %arg1[%c4] : memref<21xf32, #tpu.memory_space<smem>>
    %38 = vector.broadcast %37 : f32 to vector<1x128xf32>
    %39 = arith.mulf %38, %1 : vector<1x128xf32>
    %c5 = arith.constant 5 : index
    %40 = memref.load %arg1[%c5] : memref<21xf32, #tpu.memory_space<smem>>
    %41 = vector.broadcast %40 : f32 to vector<1x128xf32>
    %42 = arith.mulf %41, %3 : vector<1x128xf32>
    %43 = arith.addf %39, %42 : vector<1x128xf32>
    %c12 = arith.constant 12 : index
    %44 = memref.load %arg1[%c12] : memref<21xf32, #tpu.memory_space<smem>>
    %45 = vector.broadcast %44 : f32 to vector<1x128xf32>
    %46 = arith.addf %43, %45 : vector<1x128xf32>
    %cst_8 = arith.constant 0.000000e+00 : f32
    %47 = vector.broadcast %cst_8 : f32 to vector<1x128xf32>
    %48 = arith.maximumf %46, %47 : vector<1x128xf32>
    %c17 = arith.constant 17 : index
    %49 = memref.load %arg1[%c17] : memref<21xf32, #tpu.memory_space<smem>>
    %50 = vector.broadcast %49 : f32 to vector<1x128xf32>
    %51 = arith.mulf %50, %48 : vector<1x128xf32>
    %52 = arith.addf %36, %51 : vector<1x128xf32>
    %c6 = arith.constant 6 : index
    %53 = memref.load %arg1[%c6] : memref<21xf32, #tpu.memory_space<smem>>
    %54 = vector.broadcast %53 : f32 to vector<1x128xf32>
    %55 = arith.mulf %54, %1 : vector<1x128xf32>
    %c7 = arith.constant 7 : index
    %56 = memref.load %arg1[%c7] : memref<21xf32, #tpu.memory_space<smem>>
    %57 = vector.broadcast %56 : f32 to vector<1x128xf32>
    %58 = arith.mulf %57, %3 : vector<1x128xf32>
    %59 = arith.addf %55, %58 : vector<1x128xf32>
    %c13 = arith.constant 13 : index
    %60 = memref.load %arg1[%c13] : memref<21xf32, #tpu.memory_space<smem>>
    %61 = vector.broadcast %60 : f32 to vector<1x128xf32>
    %62 = arith.addf %59, %61 : vector<1x128xf32>
    %cst_9 = arith.constant 0.000000e+00 : f32
    %63 = vector.broadcast %cst_9 : f32 to vector<1x128xf32>
    %64 = arith.maximumf %62, %63 : vector<1x128xf32>
    %c18 = arith.constant 18 : index
    %65 = memref.load %arg1[%c18] : memref<21xf32, #tpu.memory_space<smem>>
    %66 = vector.broadcast %65 : f32 to vector<1x128xf32>
    %67 = arith.mulf %66, %64 : vector<1x128xf32>
    %68 = arith.addf %52, %67 : vector<1x128xf32>
    %c8 = arith.constant 8 : index
    %69 = memref.load %arg1[%c8] : memref<21xf32, #tpu.memory_space<smem>>
    %70 = vector.broadcast %69 : f32 to vector<1x128xf32>
    %71 = arith.mulf %70, %1 : vector<1x128xf32>
    %c9 = arith.constant 9 : index
    %72 = memref.load %arg1[%c9] : memref<21xf32, #tpu.memory_space<smem>>
    %73 = vector.broadcast %72 : f32 to vector<1x128xf32>
    %74 = arith.mulf %73, %3 : vector<1x128xf32>
    %75 = arith.addf %71, %74 : vector<1x128xf32>
    %c14 = arith.constant 14 : index
    %76 = memref.load %arg1[%c14] : memref<21xf32, #tpu.memory_space<smem>>
    %77 = vector.broadcast %76 : f32 to vector<1x128xf32>
    %78 = arith.addf %75, %77 : vector<1x128xf32>
    %cst_10 = arith.constant 0.000000e+00 : f32
    %79 = vector.broadcast %cst_10 : f32 to vector<1x128xf32>
    %80 = arith.maximumf %78, %79 : vector<1x128xf32>
    %c19 = arith.constant 19 : index
    %81 = memref.load %arg1[%c19] : memref<21xf32, #tpu.memory_space<smem>>
    %82 = vector.broadcast %81 : f32 to vector<1x128xf32>
    %83 = arith.mulf %82, %80 : vector<1x128xf32>
    %84 = arith.addf %68, %83 : vector<1x128xf32>
    %c20 = arith.constant 20 : index
    %85 = memref.load %arg1[%c20] : memref<21xf32, #tpu.memory_space<smem>>
    %86 = vector.broadcast %85 : f32 to vector<1x128xf32>
    %87 = arith.addf %84, %86 : vector<1x128xf32>
    %cst_11 = arith.constant 0.000000e+00 : f32
    %88 = vector.broadcast %cst_11 : f32 to vector<1x128xf32>
    %89 = arith.maximumf %87, %88 : vector<1x128xf32>
    %c0_12 = arith.constant 0 : index
    %c0_13 = arith.constant 0 : index
    %90 = vector.load %arg3[%c0_12, %c0_13] : memref<1x128xf32, #tpu.memory_space<vmem>>, vector<1x128xf32>
    tpu.vector_store %arg3[%c0_12, %c0_13], %89 {strides = array<i32>} : memref<1x128xf32, #tpu.memory_space<vmem>>, vector<1x128xf32>,
    return
  }
  func.func @transform_0(%arg0: i32) -> i32 {
    %c0_i32 = arith.constant 0 : i32
    %c0_i32_0 = arith.constant 0 : i32
    return %c0_i32 : i32
  }
  func.func @transform_1(%arg0: i32) -> (i32, i32, i32) {
    %c0_i32 = arith.constant 0 : i32
    %c0_i32_0 = arith.constant 0 : i32
    %c0_i32_1 = arith.constant 0 : i32
    return %c0_i32, %arg0, %c0_i32_0 : i32, i32, i32
  }
  func.func @transform_2(%arg0: i32) -> (i32, i32) {
    %c0_i32 = arith.constant 0 : i32
    %c0_i32_0 = arith.constant 0 : i32
    return %arg0, %c0_i32 : i32, i32
  }
}

</mosaic_0001>

<llo_original>
// kernel: tpu_custom_call.1
$region0: #{tpu_custom_call.1}
  #allocation0 [shape = 'u32[]', space=smem, size = 0x4, offset = 0x4, fixed_abs, tag = 'smem constant byte address 0x4 - core index']
  #allocation1 [shape = 'u32[72,128]{1,0:T(1,128)}', space=vmem, size = 0x9000, scoped, tag = 'internal scratch']
  %s0 = inlined_call_operand.hbm [shape: f32[21], index: 0, kind: input, shape index: {}]
  %s1 = inlined_call_operand.hbm [shape: f32[2,1,128], index: 1, kind: input, shape index: {}]
  %s2 = inlined_call_operand.hbm [shape: f32[1,128], index: 2, kind: output, shape index: {}]
  %s3 = sld [smem:[#allocation0]]
  $region26: #{tpu_custom_call.1} parent=0
    _
  %s5 = ssub.s32 1, %s3
  %s6 = scalar_select 0, %s5, %s3
  $region1: #{tpu_custom_call.1} parent=0
    #allocation2 [shape = 'u8[512]{0}', space=smem, size = 0x200, scoped, tag = 'input window, operand 0, single buffered']
    #allocation3 [shape = 's32[1]{0}', space=sflag, size = 0x4, scoped, tag = 'scoped memory for tpu_custom_call.1']
    #allocation4 [shape = 's32[1]{0}', space=sflag, size = 0x4, scoped, tag = 'scoped memory for tpu_custom_call.1']
    #allocation5 [shape = 's32[1]{0}', space=sflag, size = 0x4, scoped, tag = 'scoped memory for tpu_custom_call.1']
    #allocation6 [shape = 'u8[1024]{0}', space=vmem, size = 0x400, scoped, tag = 'input window, operand 1, single buffered']
    #allocation7 [shape = 'u8[512]{0}', space=vmem, size = 0x400, scoped, tag = 'output window, operand 0, single buffered']
    %7 = vsyncpa [#allocation5], 0
    %8 = vsyncpa [#allocation3], 0
    %9 = vsyncpa [#allocation4], 0
    // Predicated region
    $region2: #{tpu_custom_call.1} parent=1 // pred_check
      _
    $region3: #{tpu_custom_call.1} parent=1 // pred_check_branch
      %11 = sbr.rel (0) target = $region5
    $region4: #{tpu_custom_call.1} parent=1 // pred_region
      %13 = vsyncadd [#allocation5], 0
      %s15 = sshll.u32 %s0, 4
      %s16 = int_to_ptr.hbm [resolvable:$true] %s15
      %18 = dma.hbm_to_smem %s16, 16, [#allocation2], [#allocation5]
    $region5: #{tpu_custom_call.1} parent=1 // pred_fallthru
      _
    // Predicated region
    $region6: #{tpu_custom_call.1} parent=1 // pred_check
      _
    $region7: #{tpu_custom_call.1} parent=1 // pred_check_branch
      %20 = sbr.rel (0) target = $region9
    $region8: #{tpu_custom_call.1} parent=1 // pred_region
      %22 = vsyncadd [#allocation3], 0
      %s23 = sshll.u32 %s1, 4
      %s24 = int_to_ptr.hbm [resolvable:$true] %s23
      %s25 = sshll.u32 [#allocation6], 4
      %s26 = int_to_ptr.vmem [resolvable:$true] %s25
      %31 = dma.hbm_to_vmem [thread:$0]  %s24, 32, %s26, [#allocation3], 16, 16, 1
    $region9: #{tpu_custom_call.1} parent=1 // pred_fallthru
      _
    // Predicated region
    $region10: #{tpu_custom_call.1} parent=1 // pred_check
      _
    $region11: #{tpu_custom_call.1} parent=1 // pred_check_branch
      %33 = sbr.rel (0) target = $region13
    $region12: #{tpu_custom_call.1} parent=1 // pred_region
      %35 = dma.done [#allocation5], 16
    $region13: #{tpu_custom_call.1} parent=1 // pred_fallthru
      _
    // Predicated region
    $region14: #{tpu_custom_call.1} parent=1 // pred_check
      _
    $region15: #{tpu_custom_call.1} parent=1 // pred_check_branch
      %37 = sbr.rel (0) target = $region17
    $region16: #{tpu_custom_call.1} parent=1 // pred_region
      %39 = dma.done [#allocation3], 32
    $region17: #{tpu_custom_call.1} parent=1 // pred_fallthru
      _
    %40 = sfence
    %v41 = vld [vmem:[#allocation6] sm:$0x1]
    %s42 = scalar_lea.vmem [#allocation6], 1
    %v43 = vld [vmem:[%s42] sm:$0x1]
    %s44 = sld [smem:[#allocation2]]
    %v45 = vstv %s44
    %v46 = vmul.f32 %v45, %v41
    %s47 = sld [smem:[#allocation2 + $0x1]]
    %v48 = vstv %s47
    %v49 = vmul.f32 %v48, %v43
    %v50 = vadd.f32 %v46, %v49
    %s51 = sld [smem:[#allocation2 + $0xa]]
    %v52 = vstv %s51
    %v53 = vadd.f32 %v50, %v52
    %v54 = vmax.f32 %v53, 0.0
    %s55 = sld [smem:[#allocation2 + $0xf]]
    %v56 = vstv %s55
    %v57 = vmul.f32 %v56, %v54
    %v58 = vadd.f32 %v57, 0.0
    %s59 = sld [smem:[#allocation2 + $0x2]]
    %v60 = vstv %s59
    %v61 = vmul.f32 %v60, %v41
    %s62 = sld [smem:[#allocation2 + $0x3]]
    %v63 = vstv %s62
    %v64 = vmul.f32 %v63, %v43
    %v65 = vadd.f32 %v61, %v64
    %s66 = sld [smem:[#allocation2 + $0xb]]
    %v67 = vstv %s66
    %v68 = vadd.f32 %v65, %v67
    %v69 = vmax.f32 %v68, 0.0
    %s70 = sld [smem:[#allocation2 + $0x10]]
    %v71 = vstv %s70
    %v72 = vmul.f32 %v71, %v69
    %v73 = vadd.f32 %v58, %v72
    %s74 = sld [smem:[#allocation2 + $0x4]]
    %v75 = vstv %s74
    %v76 = vmul.f32 %v75, %v41
    %s77 = sld [smem:[#allocation2 + $0x5]]
    %v78 = vstv %s77
    %v79 = vmul.f32 %v78, %v43
    %v80 = vadd.f32 %v76, %v79
    %s81 = sld [smem:[#allocation2 + $0xc]]
    %v82 = vstv %s81
    %v83 = vadd.f32 %v80, %v82
    %v84 = vmax.f32 %v83, 0.0
    %s85 = sld [smem:[#allocation2 + $0x11]]
    %v86 = vstv %s85
    %v87 = vmul.f32 %v86, %v84
    %v88 = vadd.f32 %v73, %v87
    %s89 = sld [smem:[#allocation2 + $0x6]]
    %v90 = vstv %s89
    %v91 = vmul.f32 %v90, %v41
    %s92 = sld [smem:[#allocation2 + $0x7]]
    %v93 = vstv %s92
    %v94 = vmul.f32 %v93, %v43
    %v95 = vadd.f32 %v91, %v94
    %s96 = sld [smem:[#allocation2 + $0xd]]
    %v97 = vstv %s96
    %v98 = vadd.f32 %v95, %v97
    %v99 = vmax.f32 %v98, 0.0
    %s100 = sld [smem:[#allocation2 + $0x12]]
    %v101 = vstv %s100
    %v102 = vmul.f32 %v101, %v99
    %v103 = vadd.f32 %v88, %v102
    %s104 = sld [smem:[#allocation2 + $0x8]]
    %v105 = vstv %s104
    %v106 = vmul.f32 %v105, %v41
    %s107 = sld [smem:[#allocation2 + $0x9]]
    %v108 = vstv %s107
    %v109 = vmul.f32 %v108, %v43
    %v110 = vadd.f32 %v106, %v109
    %s111 = sld [smem:[#allocation2 + $0xe]]
    %v112 = vstv %s111
    %v113 = vadd.f32 %v110, %v112
    %v114 = vmax.f32 %v113, 0.0
    %s115 = sld [smem:[#allocation2 + $0x13]]
    %v116 = vstv %s115
    %v117 = vmul.f32 %v116, %v114
    %v118 = vadd.f32 %v103, %v117
    %s119 = sld [smem:[#allocation2 + $0x14]]
    %v120 = vstv %s119
    %v121 = vadd.f32 %v118, %v120
    %v122 = vmax.f32 %v121, 0.0
    %123 = vst [vmem:[#allocation7] sm:$0x1] %v122
    // Predicated region
    $region18: #{tpu_custom_call.1} parent=1 // pred_check
      _
    $region19: #{tpu_custom_call.1} parent=1 // pred_check_branch
      %125 = sbr.rel (0) target = $region21
    $region20: #{tpu_custom_call.1} parent=1 // pred_region
      %127 = vsyncadd [#allocation4], 0
      %s129 = sshll.u32 [#allocation7], 4
      %s130 = int_to_ptr.vmem [resolvable:$true] %s129
      %s131 = sshll.u32 %s2, 4
      %s132 = int_to_ptr.hbm [resolvable:$true] %s131
      %134 = dma.vmem_to_hbm [thread:$0]  %s130, 16, %s132, [#allocation4]
    $region21: #{tpu_custom_call.1} parent=1 // pred_fallthru
      _
    // Predicated region
    $region22: #{tpu_custom_call.1} parent=1 // pred_check
      _
    $region23: #{tpu_custom_call.1} parent=1 // pred_check_branch
      %136 = sbr.rel (0) target = $region25
    $region24: #{tpu_custom_call.1} parent=1 // pred_region
      %138 = dma.done [#allocation4], 16
    $region25: #{tpu_custom_call.1} parent=1 // pred_fallthru
      _
    %139 = vsyncpa [#allocation3], 1
    %140 = vsyncpa [#allocation4], 1
    %141 = vsyncpa [#allocation5], 1

</llo_original>
